<compile_context>
chip_gen: v7x
topology: tpu7x:2x2x1
jax: 0.10.0
libtpu: 0.0.40
codegen_flags: <defaults>
</compile_context>

<pallas_src>
import functools

import jax
import jax.numpy as jnp
from jax.experimental import pallas as pl
from jax.experimental.pallas import tpu as pltpu


def _make_ce_kernel(n_rows, n_cls, tile_n, tile_c):
    """Kernel closure over the static problem sizes (for masking)."""

    def kernel(logits_ref, target_ref, out_ref, m_scr, l_scr, p_scr):
        i = pl.program_id(0)                 # row-tile index ("parallel")
        j = pl.program_id(1)                 # class-tile index ("arbitrary", last)
        nj = pl.num_programs(1)

        # ---- init running log-sum-exp state at the first class tile ----
        @pl.when(j == 0)
        def _():
            m_scr[...] = jnp.full_like(m_scr, -jnp.inf)   # running max
            l_scr[...] = jnp.zeros_like(l_scr)            # running sum(exp)
            p_scr[...] = jnp.zeros_like(p_scr)            # picked target logit

        x = logits_ref[...].astype(jnp.float32)           # (tile_n, tile_c)
        t = target_ref[...]                               # (tile_n, 1) int32

        # Global class index of each lane in this class tile; mask padded lanes.
        col = jax.lax.broadcasted_iota(jnp.int32, x.shape, dimension=1) + j * tile_c
        class_ok = col < n_cls
        x_m = jnp.where(class_ok, x, -jnp.inf)

        # ---- online (streaming) log-sum-exp update ----
        m_prev = m_scr[...]
        m_new = jnp.maximum(m_prev, jnp.max(x_m, axis=-1, keepdims=True))
        l_scr[...] = (l_scr[...] * jnp.exp(m_prev - m_new)
                      + jnp.sum(jnp.exp(x_m - m_new), axis=-1, keepdims=True))
        m_scr[...] = m_new

        # Accumulate the logit at the target class when it falls in this tile
        # (exactly one class tile matches per row; max cancels algebraically,
        # so the raw value is accumulated).
        p_scr[...] += jnp.sum(jnp.where(col == t, x, 0.0), axis=-1, keepdims=True)

        # ---- finalize: one lane-dense store per row tile ----
        @pl.when(j == nj - 1)
        def _():
            per_sample = m_scr[...] + jnp.log(l_scr[...]) - p_scr[...]   # (tile_n, 1)
            row = jax.lax.broadcasted_iota(jnp.int32, per_sample.shape, 0) + i * tile_n
            per_sample = jnp.where(row < n_rows, per_sample, 0.0)        # ragged rows
            tile_sum = jnp.sum(per_sample)
            out_ref[...] = jnp.full(out_ref.shape, tile_sum, dtype=jnp.float32)

    return kernel


def _pick_tiles(n, c, itemsize):
    """Tile sizes that fit the scoped-VMEM budget on every TPU generation."""
    # Class tile: full C when small, else a 2048-lane (multiple of 128) tile.
    if c <= 4096:
        tile_c = c
    else:
        tile_c = 2048
    # Row tile: keep one logits buffer <= ~4 MiB (double-buffered ~8 MiB),
    # comfortably inside v7x's 32 MiB scoped / 64 MiB physical VMEM.
    max_block_bytes = 4 * 1024 * 1024
    tile_n = max(1, max_block_bytes // max(1, tile_c * itemsize))
    tile_n = min(tile_n, 512)
    if n >= 8:
        tile_n = max(8, min(tile_n, n))
        tile_n = (tile_n // 8) * 8          # sublane-aligned; ragged tail masked
    else:
        tile_n = n                          # block == full dim -> allowed
    return tile_n, tile_c


def ce_loss(logits, target):
    """logits: (N, C) float, target: (N,) int -> scalar float32 mean CE loss."""
    n, c = logits.shape
    itemsize = jnp.dtype(logits.dtype).itemsize
    tile_n, tile_c = _pick_tiles(n, c, itemsize)
    num_i = pl.cdiv(n, tile_n)
    num_j = pl.cdiv(c, tile_c)

    target2d = target.astype(jnp.int32).reshape(n, 1)

    kernel = _make_ce_kernel(n, c, tile_n, tile_c)

    cost = pl.CostEstimate(
        flops=5 * n * c,
        transcendentals=n * c,
        bytes_accessed=n * c * itemsize + n * 4 + num_i * 8 * 128 * 4,
    )

    partials = pl.pallas_call(
        kernel,
        out_shape=jax.ShapeDtypeStruct((num_i, 8, 128), jnp.float32),
        grid_spec=pltpu.PrefetchScalarGridSpec(
            num_scalar_prefetch=0,
            grid=(num_i, num_j),                       # reduction (class) axis last
            in_specs=[
                pl.BlockSpec((tile_n, tile_c), lambda i, j: (i, j)),
                pl.BlockSpec((tile_n, 1), lambda i, j: (i, 0)),
            ],
            out_specs=pl.BlockSpec((1, 8, 128), lambda i, j: (i, 0, 0)),
            scratch_shapes=[
                pltpu.VMEM((tile_n, 1), jnp.float32),   # running max
                pltpu.VMEM((tile_n, 1), jnp.float32),   # running sum(exp)
                pltpu.VMEM((tile_n, 1), jnp.float32),   # picked target logit
            ],
        ),
        compiler_params=pltpu.CompilerParams(
            dimension_semantics=("parallel", "arbitrary"),
            # Raises v5e's 16 MiB scoped default; equals v6e/v7x default and
            # stays well under v7x's 64 MiB physical VMEM.
            vmem_limit_bytes=32 * 1024 * 1024,
        ),
        cost_estimate=cost,
    )(logits, target2d)

    # Finish the mean reduction in JAX: one partial per row tile.
    return jnp.sum(partials[:, 0, 0]) / jnp.float32(n)


if __name__ == "__main__":
    key = jax.random.PRNGKey(0)
    k1, k2 = jax.random.split(key)

    N, C = 8, 32  # small shapes: batch=8, num_classes=32
    logits = jax.random.normal(k1, (N, C), dtype=jnp.float32)
    target = jax.random.randint(k2, (N,), 0, C, dtype=jnp.int32)

    loss = ce_loss(logits, target)
    jax.block_until_ready(loss)

    # Reference check against plain-JAX cross entropy (F.cross_entropy, mean).
    logp = jax.nn.log_softmax(logits, axis=-1)
    ref = -jnp.mean(logp[jnp.arange(N), target])
    assert jnp.allclose(loss, ref, atol=1e-5, rtol=1e-5), (loss, ref)

    print("KERNEL_OK")
</pallas_src>

<mosaic_0001>
module attributes {stable_mosaic.version = 11 : i64} {
  func.func @kernel(%arg0: i32, %arg1: i32, %arg2: memref<8x32xf32, #tpu.memory_space<vmem>>, %arg3: memref<8x1xi32, #tpu.memory_space<vmem>>, %arg4: memref<1x8x128xf32, #tpu.memory_space<vmem>>, %arg5: memref<8x1xf32, #tpu.memory_space<vmem>>, %arg6: memref<8x1xf32, #tpu.memory_space<vmem>>, %arg7: memref<8x1xf32, #tpu.memory_space<vmem>>) attributes {dimension_semantics = [#tpu.dimension_semantics<parallel>, #tpu.dimension_semantics<arbitrary>], iteration_bounds = array<i64: 1, 1>, scalar_prefetch = 0 : i64, scratch_operands = 3 : i64, tpu.core_type = #tpu.core_type<tc>, window_params = [{transform_indices = @transform_0, window_bounds = array<i64: 8, 32>}, {transform_indices = @transform_1, window_bounds = array<i64: 8, 1>}, {transform_indices = @transform_2, window_bounds = array<i64: 1, 8, 128>}]} {
    %c0_i32 = arith.constant 0 : i32
    %0 = arith.cmpi eq, %arg1, %c0_i32 : i32
    %1 = arith.extui %0 : i1 to i32
    %c0_i32_0 = arith.constant 0 : i32
    %2 = arith.cmpi ne, %1, %c0_i32_0 : i32
    scf.if %2 {
      %cst_23 = arith.constant 0xFF800000 : f32
      %41 = vector.broadcast %cst_23 : f32 to vector<8x1xf32>
      %c0_24 = arith.constant 0 : index
      %c0_25 = arith.constant 0 : index
      %42 = vector.load %arg5[%c0_24, %c0_25] : memref<8x1xf32, #tpu.memory_space<vmem>>, vector<8x1xf32>
      tpu.vector_store %arg5[%c0_24, %c0_25], %41 {strides = array<i32>} : memref<8x1xf32, #tpu.memory_space<vmem>>, vector<8x1xf32>,
      %cst_26 = arith.constant 0.000000e+00 : f32
      %43 = vector.broadcast %cst_26 : f32 to vector<8x1xf32>
      %c0_27 = arith.constant 0 : index
      %c0_28 = arith.constant 0 : index
      %44 = vector.load %arg6[%c0_27, %c0_28] : memref<8x1xf32, #tpu.memory_space<vmem>>, vector<8x1xf32>
      tpu.vector_store %arg6[%c0_27, %c0_28], %43 {strides = array<i32>} : memref<8x1xf32, #tpu.memory_space<vmem>>, vector<8x1xf32>,
      %cst_29 = arith.constant 0.000000e+00 : f32
      %45 = vector.broadcast %cst_29 : f32 to vector<8x1xf32>
      %c0_30 = arith.constant 0 : index
      %c0_31 = arith.constant 0 : index
      %46 = vector.load %arg7[%c0_30, %c0_31] : memref<8x1xf32, #tpu.memory_space<vmem>>, vector<8x1xf32>
      tpu.vector_store %arg7[%c0_30, %c0_31], %45 {strides = array<i32>} : memref<8x1xf32, #tpu.memory_space<vmem>>, vector<8x1xf32>,
    } else {
    }
    %c0 = arith.constant 0 : index
    %c0_1 = arith.constant 0 : index
    %3 = vector.load %arg2[%c0, %c0_1] : memref<8x32xf32, #tpu.memory_space<vmem>>, vector<8x32xf32>
    %c0_2 = arith.constant 0 : index
    %c0_3 = arith.constant 0 : index
    %4 = vector.load %arg3[%c0_2, %c0_3] : memref<8x1xi32, #tpu.memory_space<vmem>>, vector<8x1xi32>
    %5 = tpu.iota {dimensions = array<i32: 1>} : vector<8x32xi32>
    %c32_i32 = arith.constant 32 : i32
    %6 = arith.muli %arg1, %c32_i32 : i32
    %7 = vector.broadcast %6 : i32 to vector<8x32xi32>
    %8 = arith.addi %5, %7 : vector<8x32xi32>
    %c32_i32_4 = arith.constant 32 : i32
    %9 = vector.broadcast %c32_i32_4 : i32 to vector<8x32xi32>
    %10 = arith.cmpi slt, %8, %9 : vector<8x32xi32>
    %cst = arith.constant 0xFF800000 : f32
    %11 = vector.broadcast %cst : f32 to vector<8x32xf32>
    %12 = arith.select %10, %3, %11 : vector<8x32xi1>, vector<8x32xf32>
    %c0_5 = arith.constant 0 : index
    %c0_6 = arith.constant 0 : index
    %13 = vector.load %arg5[%c0_5, %c0_6] : memref<8x1xf32, #tpu.memory_space<vmem>>, vector<8x1xf32>
    %cst_7 = arith.constant dense<0xFF800000> : vector<8xf32>
    %14 = vector.multi_reduction <maximumf>, %12, %cst_7 [1] : vector<8x32xf32> to vector<8xf32>
    %15 = vector.shape_cast %14 : vector<8xf32> to vector<8x1xf32>
    %16 = arith.maximumf %13, %15 : vector<8x1xf32>
    %c0_8 = arith.constant 0 : index
    %c0_9 = arith.constant 0 : index
    %17 = vector.load %arg6[%c0_8, %c0_9] : memref<8x1xf32, #tpu.memory_space<vmem>>, vector<8x1xf32>
    %18 = arith.subf %13, %16 : vector<8x1xf32>
    %19 = math.exp %18 : vector<8x1xf32>
    %20 = arith.mulf %17, %19 : vector<8x1xf32>
    %21 = vector.broadcast %16 : vector<8x1xf32> to vector<8x32xf32>
    %22 = arith.subf %12, %21 : vector<8x32xf32>
    %23 = math.exp %22 : vector<8x32xf32>
    %cst_10 = arith.constant dense<0.000000e+00> : vector<8xf32>
    %24 = vector.multi_reduction <add>, %23, %cst_10 [1] : vector<8x32xf32> to vector<8xf32>
    %25 = vector.shape_cast %24 : vector<8xf32> to vector<8x1xf32>
    %26 = arith.addf %20, %25 : vector<8x1xf32>
    %c0_11 = arith.constant 0 : index
    %c0_12 = arith.constant 0 : index
    %27 = vector.load %arg6[%c0_11, %c0_12] : memref<8x1xf32, #tpu.memory_space<vmem>>, vector<8x1xf32>
    tpu.vector_store %arg6[%c0_11, %c0_12], %26 {strides = array<i32>} : memref<8x1xf32, #tpu.memory_space<vmem>>, vector<8x1xf32>,
    %c0_13 = arith.constant 0 : index
    %c0_14 = arith.constant 0 : index
    %28 = vector.load %arg5[%c0_13, %c0_14] : memref<8x1xf32, #tpu.memory_space<vmem>>, vector<8x1xf32>
    tpu.vector_store %arg5[%c0_13, %c0_14], %16 {strides = array<i32>} : memref<8x1xf32, #tpu.memory_space<vmem>>, vector<8x1xf32>,
    %c0_15 = arith.constant 0 : index
    %c0_16 = arith.constant 0 : index
    %29 = vector.load %arg7[%c0_15, %c0_16] : memref<8x1xf32, #tpu.memory_space<vmem>>, vector<8x1xf32>
    %30 = vector.broadcast %4 : vector<8x1xi32> to vector<8x32xi32>
    %31 = arith.cmpi eq, %8, %30 : vector<8x32xi32>
    %cst_17 = arith.constant 0.000000e+00 : f32
    %32 = vector.broadcast %cst_17 : f32 to vector<8x32xf32>
    %33 = arith.select %31, %3, %32 : vector<8x32xi1>, vector<8x32xf32>
    %cst_18 = arith.constant dense<0.000000e+00> : vector<8xf32>
    %34 = vector.multi_reduction <add>, %33, %cst_18 [1] : vector<8x32xf32> to vector<8xf32>
    %35 = vector.shape_cast %34 : vector<8xf32> to vector<8x1xf32>
    %36 = arith.addf %29, %35 : vector<8x1xf32>
    %c0_19 = arith.constant 0 : index
    %c0_20 = arith.constant 0 : index
    %37 = vector.load %arg7[%c0_19, %c0_20] : memref<8x1xf32, #tpu.memory_space<vmem>>, vector<8x1xf32>
    tpu.vector_store %arg7[%c0_19, %c0_20], %36 {strides = array<i32>} : memref<8x1xf32, #tpu.memory_space<vmem>>, vector<8x1xf32>,
    %c0_i32_21 = arith.constant 0 : i32
    %38 = arith.cmpi eq, %arg1, %c0_i32_21 : i32
    %39 = arith.extui %38 : i1 to i32
    %c0_i32_22 = arith.constant 0 : i32
    %40 = arith.cmpi ne, %39, %c0_i32_22 : i32
    scf.if %40 {
      %c0_23 = arith.constant 0 : index
      %c0_24 = arith.constant 0 : index
      %41 = vector.load %arg5[%c0_23, %c0_24] : memref<8x1xf32, #tpu.memory_space<vmem>>, vector<8x1xf32>
      %c0_25 = arith.constant 0 : index
      %c0_26 = arith.constant 0 : index
      %42 = vector.load %arg6[%c0_25, %c0_26] : memref<8x1xf32, #tpu.memory_space<vmem>>, vector<8x1xf32>
      %43 = math.log %42 : vector<8x1xf32>
      %44 = arith.addf %41, %43 : vector<8x1xf32>
      %c0_27 = arith.constant 0 : index
      %c0_28 = arith.constant 0 : index
      %45 = vector.load %arg7[%c0_27, %c0_28] : memref<8x1xf32, #tpu.memory_space<vmem>>, vector<8x1xf32>
      %46 = arith.subf %44, %45 : vector<8x1xf32>
      %47 = tpu.iota {dimensions = array<i32: 0>} : vector<8x1xi32>
      %c8_i32 = arith.constant 8 : i32
      %48 = arith.muli %arg0, %c8_i32 : i32
      %49 = vector.broadcast %48 : i32 to vector<8x1xi32>
      %50 = arith.addi %47, %49 : vector<8x1xi32>
      %c8_i32_29 = arith.constant 8 : i32
      %51 = vector.broadcast %c8_i32_29 : i32 to vector<8x1xi32>
      %52 = arith.cmpi slt, %50, %51 : vector<8x1xi32>
      %cst_30 = arith.constant 0.000000e+00 : f32
      %53 = vector.broadcast %cst_30 : f32 to vector<8x1xf32>
      %54 = arith.select %52, %46, %53 : vector<8x1xi1>, vector<8x1xf32>
      %55 = vector.shape_cast %54 : vector<8x1xf32> to vector<1x8x1xf32>
      %cst_31 = arith.constant dense<0.000000e+00> : vector<1xf32>
      %56 = vector.multi_reduction <add>, %55, %cst_31 [1, 2] : vector<1x8x1xf32> to vector<1xf32>
      %57 = vector.shape_cast %56 : vector<1xf32> to vector<1x1x1xf32>
      %58 = vector.extract %57[0, 0, 0] : f32 from vector<1x1x1xf32>
      %59 = vector.broadcast %58 : f32 to vector<1x8x128xf32>
      %c0_32 = arith.constant 0 : index
      %c0_33 = arith.constant 0 : index
      %c0_34 = arith.constant 0 : index
      %60 = vector.load %arg4[%c0_32, %c0_33, %c0_34] : memref<1x8x128xf32, #tpu.memory_space<vmem>>, vector<1x8x128xf32>
      tpu.vector_store %arg4[%c0_32, %c0_33, %c0_34], %59 {strides = array<i32>} : memref<1x8x128xf32, #tpu.memory_space<vmem>>, vector<1x8x128xf32>,
    } else {
    }
    return
  }
  func.func @transform_0(%arg0: i32, %arg1: i32) -> (i32, i32) {
    %c0_i32 = arith.constant 0 : i32
    return %arg0, %arg1 : i32, i32
  }
  func.func @transform_1(%arg0: i32, %arg1: i32) -> (i32, i32) {
    %c0_i32 = arith.constant 0 : i32
    %c0_i32_0 = arith.constant 0 : i32
    return %arg0, %c0_i32 : i32, i32
  }
  func.func @transform_2(%arg0: i32, %arg1: i32) -> (i32, i32, i32) {
    %c0_i32 = arith.constant 0 : i32
    %c0_i32_0 = arith.constant 0 : i32
    %c0_i32_1 = arith.constant 0 : i32
    return %arg0, %c0_i32, %c0_i32_0 : i32, i32, i32
  }
}

</mosaic_0001>

<llo_original>
// kernel: tpu_custom_call.1
$region0: #{tpu_custom_call.1}
  #allocation0 [shape = 'u32[]', space=smem, size = 0x4, offset = 0x4, fixed_abs, tag = 'smem constant byte address 0x4 - core index']
  #allocation1 [shape = 'u32[144,128]{1,0:T(1,128)}', space=vmem, size = 0x12000, scoped, tag = 'internal scratch']
  #allocation2 [shape = 'f32[8,1]{1,0:T(8,128)}', space=vmem, size = 0x1000, scoped, tag = 'scratch operand']
  #allocation3 [shape = 'f32[8,1]{1,0:T(8,128)}', space=vmem, size = 0x1000, scoped, tag = 'scratch operand']
  #allocation4 [shape = 'f32[8,1]{1,0:T(8,128)}', space=vmem, size = 0x1000, scoped, tag = 'scratch operand']
  %s0 = inlined_call_operand.vmem [shape: f32[8,32], index: 0, kind: input, shape index: {}]
  %s1 = inlined_call_operand.vmem [shape: s32[8,1], index: 1, kind: input, shape index: {}]
  %s2 = inlined_call_operand.hbm [shape: f32[1,8,128], index: 2, kind: output, shape index: {}]
  %s3 = sld [smem:[#allocation0]]
  $region26: #{tpu_custom_call.1} parent=0
    _
  %s5 = ssub.s32 1, %s3
  %s6 = scalar_select 0, %s5, %s3
  $region1: #{tpu_custom_call.1} parent=0
    #allocation5 [shape = 'u8[4096]{0}', space=vmem, size = 0x1000, scoped, tag = 'output window, operand 0, single buffered']
    #allocation6 [shape = 's32[1]{0}', space=sflag, size = 0x4, scoped, tag = 'scoped memory for tpu_custom_call.1']
    %7 = vsyncpa [#allocation6], 0
    // Predicated region
    $region2: #{tpu_custom_call.1} parent=1 // pred_check
      _
    $region3: #{tpu_custom_call.1} parent=1 // pred_check_branch
      %9 = sbr.rel (0) target = $region5
    $region4: #{tpu_custom_call.1} parent=1 // pred_region
      _
    $region5: #{tpu_custom_call.1} parent=1 // pred_fallthru
      _
    // Predicated region
    $region6: #{tpu_custom_call.1} parent=1 // pred_check
      _
    $region7: #{tpu_custom_call.1} parent=1 // pred_check_branch
      %11 = sbr.rel (0) target = $region9
    $region8: #{tpu_custom_call.1} parent=1 // pred_region
      _
    $region9: #{tpu_custom_call.1} parent=1 // pred_fallthru
      _
    %p12 = scmp.eq.s32.totalorder 0, 0
    // Predicated region
    $region10: #{tpu_custom_call.1} parent=1 // pred_check
      %p13 = pneg %p12
    $region11: #{tpu_custom_call.1} parent=1 // pred_check_branch
      %15 = sbr.rel (%p13) target = $region13
    $region12: #{tpu_custom_call.1} parent=1 // pred_region
      %vm16 = vcmask 7168
      %17 = vst.msk [vmem:[#allocation2] sm:$0xff] %vm16, -inf
      %18 = vst.msk [vmem:[#allocation3] sm:$0xff] %vm16, 0.0
      %19 = vst.msk [vmem:[#allocation4] sm:$0xff] %vm16, 0.0
    $region13: #{tpu_custom_call.1} parent=1 // pred_fallthru
      _
    %v20 = vld [vmem:[%s0] sm:$0xff]
    %v21 = vld [vmem:[%s1] sm:$0xff]
    %v22 = vlaneseq
    %v23 = vand.u32 %v22, 127
    %s24 = smul.u32 0, 32
    %v25 = vstv %s24
    %v26 = vadd.s32 %v23, %v25
    %vm27 = vcmp.lt.s32.totalorder %v26, 32
    %v28 = vsel %vm27, %v20, -inf
    %v29 = vld [vmem:[#allocation2] sm:$0xff]
    %vm30 = vcmask 261120
    %v31 = vsel %vm30, %v28, -inf
    %32 = vmax.xlane.f32.xlu0 %v31
    %v33 = vpop.xlane.xlu0 %32
    %v34 = vmax.f32 %v29, %v33
    %v35 = vld [vmem:[#allocation3] sm:$0xff]
    %v36 = vsub.f32 %v29, %v34
    %v37 = vmul.f32 %v36, 1.442695
    %v38 = vpow.pop %v37
    %v39 = vmul.f32 %v35, %v38
    %41 = vset.pattern.permute.xlu0 0
    %42 = vperm.xlu0 %41, %v34
    %v43 = vpop.permute.xlu0 %42
    %v45 = vsub.f32 %v28, %v43
    %v46 = vmul.f32 %v45, 1.442695
    %v47 = vpow.pop %v46
    %v48 = vsel %vm30, %v47, 0.0
    %49 = vadd.xlane.f32.xlu0 %v48
    %v50 = vpop.xlane.xlu0 %49
    %v51 = vadd.f32 %v39, %v50
    %vm52 = vcmask 7168
    %53 = vst.msk [vmem:[#allocation3] sm:$0xff] %vm52, %v51
    %54 = vst.msk [vmem:[#allocation2] sm:$0xff] %vm52, %v34
    %v55 = vld [vmem:[#allocation4] sm:$0xff]
    %56 = vset.pattern.permute.xlu0 0
    %57 = vperm.xlu0 %56, %v21
    %v58 = vpop.permute.xlu0 %57
    %vm59 = vcmp.eq.s32.totalorder %v26, %v58
    %v60 = vsel %vm59, %v20, 0.0
    %v61 = vsel %vm30, %v60, 0.0
    %62 = vadd.xlane.f32.xlu0 %v61
    %v63 = vpop.xlane.xlu0 %62
    %v64 = vadd.f32 %v55, %v63
    %65 = vst.msk [vmem:[#allocation4] sm:$0xff] %vm52, %v64
    // Predicated region
    $region14: #{tpu_custom_call.1} parent=1 // pred_check
      %p66 = pneg %p12
    $region15: #{tpu_custom_call.1} parent=1 // pred_check_branch
      %68 = sbr.rel (%p66) target = $region17
    $region16: #{tpu_custom_call.1} parent=1 // pred_region
      %v69 = vld [vmem:[#allocation2] sm:$0xff]
      %v70 = vld [vmem:[#allocation3] sm:$0xff]
      %v71 = vlog2.pop %v70
      %v72 = vmul.f32 %v71, 0.6931472
      %v73 = vadd.f32 %v69, %v72
      %v74 = vld [vmem:[#allocation4] sm:$0xff]
      %v75 = vsub.f32 %v73, %v74
      %v76 = vlaneseq
      %v77 = vshrl.u32 %v76, 7
      %s78 = smul.u32 0, 8
      %v79 = vstv %s78
      %v80 = vadd.s32 %v77, %v79
      %vm81 = vcmp.lt.s32.totalorder %v80, 8
      %v82 = vsel %vm81, %v75, 0.0
      %v83 = vsel %vm52, %v82, 0.0
      %84 = vadd.xlane.f32.xlu0 %v83
      %v85 = vpop.xlane.xlu0 %84
      %v86 = vrot.slane %v85, 4
      %v87 = vadd.f32 %v85, %v86
      %v88 = vrot.slane %v87, 2
      %v89 = vadd.f32 %v87, %v88
      %v90 = vrot.slane %v89, 1
      %v91 = vadd.f32 %v89, %v90
      %s92 = vtos %v91
      %v93 = vstv %s92
      %94 = vst [vmem:[#allocation5] sm:$0xff] %v93
    $region17: #{tpu_custom_call.1} parent=1 // pred_fallthru
      _
    // Predicated region
    $region18: #{tpu_custom_call.1} parent=1 // pred_check
      _
    $region19: #{tpu_custom_call.1} parent=1 // pred_check_branch
      %96 = sbr.rel (0) target = $region21
    $region20: #{tpu_custom_call.1} parent=1 // pred_region
      %s98 = ssub.s32 128, 128
      %99 = vsyncadd [#allocation6], %s98
      %s101 = sshll.u32 [#allocation5], 4
      %s102 = int_to_ptr.vmem [resolvable:$true] %s101
      %104 = dma.vmem_to_hbm [thread:$0]  %s102, 128, %s2, [#allocation6]
    $region21: #{tpu_custom_call.1} parent=1 // pred_fallthru
      _
    // Predicated region
    $region22: #{tpu_custom_call.1} parent=1 // pred_check
      _
    $region23: #{tpu_custom_call.1} parent=1 // pred_check_branch
      %106 = sbr.rel (0) target = $region25
    $region24: #{tpu_custom_call.1} parent=1 // pred_region
      %107 = dma.done [#allocation6], 128
    $region25: #{tpu_custom_call.1} parent=1 // pred_fallthru
      _
    %108 = vsyncpa [#allocation6], 1

</llo_original>
